<compile_context>
chip_gen: v6e
topology: v6e:2x2x1
jax: 0.10.0
libtpu: 0.0.40
codegen_flags: <defaults>
</compile_context>

<pallas_src>
import jax
import jax.numpy as jnp
import numpy as np
from jax.experimental import pallas as pl
from jax.experimental.pallas import tpu as pltpu

K = 3  # transposed-conv kernel size (fixed by the module)


# ----------------------------- Pallas kernel --------------------------------
def ga_kernel(g4_ref, xph_ref, w_all_ref, b2_ref, wc1_ref, bc1_ref, wc2_ref,
              bc2_ref, out_ref):
    # Phase-major layout: rows = 4 phases x Cout channels, lanes = phase-grid positions.
    #   g4_ref   : (1, 4*Cin, TP)  bf16   4 unit-shifted views of g (shared by phases)
    #   xph_ref  : (1, 4*Cout, TP) f32    pad2same(x) sampled at each output phase
    #   w_all_ref: (8*Cout, 4*Cin) bf16   [transconv1 phases ; transconv2 phases]
    #   b2_ref   : (4*Cout, 1) f32        transconv2 bias (tiled per phase)
    #   wc1_ref  : (4*Cout, 4*Cout) bf16  block-diag 1x1 conv1 weight (per phase)
    #   bc1_ref  : (4*Cout, 1) f32        conv1 bias (tiled per phase)
    #   wc2_ref  : (8, 4*Cout) bf16       block-diag 1x1 conv2 weight (rows 4..7 pad)
    #   bc2_ref  : (1,) f32 in SMEM       conv2 bias (scalar)
    #   out_ref  : (1, 4*Cout, TP) bf16   gated g2, phase-major
    c4 = xph_ref.shape[1]            # 4 * Cout
    cout = c4 // 4

    # One fused polyphase GEMM: both transposed convs x 4 output phases.
    t = jnp.dot(w_all_ref[...], g4_ref[0], preferred_element_type=jnp.float32)
    t1 = t[:c4]                      # transconv1(g)        (gt, no bias)
    t2 = t[c4:] + b2_ref[...]        # transconv2(g) + bias (g2)

    s = t1 + xph_ref[0]              # gt + pad2same(x)     (x kept f32)
    h = jnp.dot(wc1_ref[...], s.astype(jnp.bfloat16),
                preferred_element_type=jnp.float32) + bc1_ref[...]
    h = jnp.maximum(h, 0.0)          # relu(conv1)
    logit = jnp.dot(wc2_ref[...], h.astype(jnp.bfloat16),
                    preferred_element_type=jnp.float32) + bc2_ref[0]
    ga = jax.nn.sigmoid(logit)       # rows 0..3 = per-phase gate

    # Gate each phase's Cout channels (Cout multiple of 8 keeps slices tile-aligned).
    gated = jnp.concatenate(
        [ga[ph:ph + 1] * t2[ph * cout:(ph + 1) * cout] for ph in range(4)], axis=0)
    out_ref[0] = gated.astype(out_ref.dtype)


# ------------------------ one-time weight packing (init) ---------------------
def pack_ga_params(params):
    """Pack the module weights into the kernel layout ONCE (at model init)."""
    f32 = jnp.float32
    Cin, Cout = params["wt1"].shape[0], params["wt1"].shape[1]

    # Polyphase weights: for output position (2m+r, 2p+s) the taps are
    #   ee: V00*W00 + V01*W02 + V10*W20 + V11*W22
    #   eo: V00*W01 + V10*W21
    #   oe: V00*W10 + V01*W12
    #   oo: V00*W11
    # where V00=g[m,p], V01=g[m,p-1], V10=g[m-1,p], V11=g[m-1,p-1].
    def phase_rows(wt):                                  # wt: (Cin, Cout, 3, 3)
        tap = lambda kh, kw: wt[:, :, kh, kw].T          # (Cout, Cin)
        z = jnp.zeros((Cout, Cin), wt.dtype)
        rows = [jnp.concatenate([tap(0, 0), tap(0, 2), tap(2, 0), tap(2, 2)], axis=1),
                jnp.concatenate([tap(0, 1), z,         tap(2, 1), z        ], axis=1),
                jnp.concatenate([tap(1, 0), tap(1, 2), z,         z        ], axis=1),
                jnp.concatenate([tap(1, 1), z,         z,         z        ], axis=1)]
        return jnp.concatenate(rows, axis=0)             # (4*Cout, 4*Cin)

    eye4 = jnp.eye(4, dtype=f32)
    w_all = jnp.concatenate([phase_rows(params["wt1"]),            # gt (no bias)
                             phase_rows(params["wt2"])], axis=0)   # g2
    wc2 = jnp.pad(jnp.kron(eye4, params["wc2"][:, :, 0, 0].astype(f32)),
                  ((0, 4), (0, 0)))                                # (8, 4*Cout)
    return {
        "w_all": w_all.astype(jnp.bfloat16),                               # (8*Cout, 4*Cin)
        "b2":    jnp.tile(params["bt2"], 4).reshape(4 * Cout, 1).astype(f32),
        "wc1":   jnp.kron(eye4, params["wc1"][:, :, 0, 0].astype(f32)).astype(jnp.bfloat16),
        "bc1":   jnp.tile(params["bc1"], 4).reshape(4 * Cout, 1).astype(f32),
        "wc2":   wc2.astype(jnp.bfloat16),
        "bc2":   params["bc2"].reshape(1).astype(f32),
    }


# ------------------------------ JAX wrapper ----------------------------------
def ga_forward(x, g, packed, *, tile_p=512):
    f32 = jnp.float32
    N, Cin, Hg, Wg = g.shape
    Cout = packed["w_all"].shape[0] // 8
    OH, OW = 2 * Hg + 1, 2 * Wg + 1          # ConvTranspose2d(k=3, s=2, p=0) output
    assert x.shape[1] == Cout and x.shape[2] <= OH and x.shape[3] <= OW
    Hp, Wp = Hg + 1, Wg + 1                  # phase grid: output pos = (2m+r, 2p+s)
    Pp = Hp * Wp

    # Lane tile: multiple of 256 (v6e/v7x MXU lane width), capped for tiny inputs.
    tile = max(256, int(tile_p))
    tile = min(tile, ((Pp + 255) // 256) * 256)
    n_pt = pl.cdiv(Pp, tile)
    Pp_pad = n_pt * tile

    # ---- polyphase input: 4 unit-shifted views of g on the (Hp, Wp) phase grid ----
    gf = g.astype(f32)
    v00 = jnp.pad(gf, ((0, 0), (0, 0), (0, 1), (0, 1)))   # g[m  , p  ]
    v01 = jnp.pad(gf, ((0, 0), (0, 0), (0, 1), (1, 0)))   # g[m  , p-1]
    v10 = jnp.pad(gf, ((0, 0), (0, 0), (1, 0), (0, 1)))   # g[m-1, p  ]
    v11 = jnp.pad(gf, ((0, 0), (0, 0), (1, 0), (1, 0)))   # g[m-1, p-1]
    g4 = jnp.concatenate([v00, v01, v10, v11], axis=1).reshape(N, 4 * Cin, Pp)
    g4 = jnp.pad(g4, ((0, 0), (0, 0), (0, Pp_pad - Pp))).astype(jnp.bfloat16)

    # ---- skip connection: pad2same(x), then split into the 4 phases (kept f32) ----
    dY, dX = OH - x.shape[2], OW - x.shape[3]
    xp = jnp.pad(x.astype(f32),
                 ((0, 0), (0, 0),
                  (dY // 2, dY - dY // 2 + 1),            # +1 -> even (2*Hp, 2*Wp) grid
                  (dX // 2, dX - dX // 2 + 1)))
    xph = (xp.reshape(N, Cout, Hp, 2, Wp, 2)
             .transpose(0, 3, 5, 1, 2, 4)                 # (N, r, s, Cout, Hp, Wp)
             .reshape(N, 4 * Cout, Pp))
    xph = jnp.pad(xph, ((0, 0), (0, 0), (0, Pp_pad - Pp)))

    # VMEM budget ~2x the double-buffered block footprint (well under v7x's 64 MiB).
    blk_bytes = tile * (4 * Cin * 2 + 4 * Cout * 4 + 4 * Cout * 2)
    vmem_limit = int(min(max(4 * blk_bytes, 8 << 20), 48 << 20))

    out_ph = pl.pallas_call(
        ga_kernel,
        out_shape=jax.ShapeDtypeStruct((N, 4 * Cout, Pp_pad), jnp.bfloat16),
        grid_spec=pltpu.PrefetchScalarGridSpec(
            num_scalar_prefetch=0,
            grid=(N, n_pt),
            in_specs=[
                pl.BlockSpec((1, 4 * Cin, tile), lambda n, t: (n, 0, t)),
                pl.BlockSpec((1, 4 * Cout, tile), lambda n, t: (n, 0, t)),
                pl.BlockSpec((8 * Cout, 4 * Cin), lambda n, t: (0, 0)),
                pl.BlockSpec((4 * Cout, 1), lambda n, t: (0, 0)),
                pl.BlockSpec((4 * Cout, 4 * Cout), lambda n, t: (0, 0)),
                pl.BlockSpec((4 * Cout, 1), lambda n, t: (0, 0)),
                pl.BlockSpec((8, 4 * Cout), lambda n, t: (0, 0)),
                pl.BlockSpec(memory_space=pltpu.MemorySpace.SMEM),
            ],
            out_specs=pl.BlockSpec((1, 4 * Cout, tile), lambda n, t: (n, 0, t)),
        ),
        compiler_params=pltpu.CompilerParams(
            dimension_semantics=("parallel", "parallel"),
            vmem_limit_bytes=vmem_limit),
    )(g4, xph, packed["w_all"], packed["b2"], packed["wc1"], packed["bc1"],
      packed["wc2"], packed["bc2"])

    # ---- interleave the 4 phases back into NCHW, crop the even-grid overhang ------
    o = out_ph[:, :, :Pp].reshape(N, 2, 2, Cout, Hp, Wp)
    o = o.transpose(0, 3, 4, 1, 5, 2).reshape(N, Cout, 2 * Hp, 2 * Wp)
    return o[:, :, :OH, :OW]                               # bf16 NCHW output


# -------------------------- pure-JAX reference (NCHW, f32) -------------------
def ga_reference(x, g, params):
    N, Cin, Hg, Wg = g.shape
    Cout = params["wt1"].shape[1]
    OH, OW = 2 * Hg + 1, 2 * Wg + 1

    def transconv(inp, w, b):
        out = jnp.zeros((N, Cout, OH, OW), jnp.float32)
        for kh in range(K):
            for kw in range(K):
                contrib = jnp.einsum("nchw,cd->ndhw", inp, w[:, :, kh, kw])
                out = out.at[:, :, kh:kh + 2 * Hg:2, kw:kw + 2 * Wg:2].add(contrib)
        if b is not None:
            out = out + b.reshape(1, Cout, 1, 1)
        return out

    g2 = transconv(g, params["wt2"], params["bt2"])
    gt = transconv(g, params["wt1"], None)
    dY, dX = OH - x.shape[2], OW - x.shape[3]
    xp = jnp.pad(x, ((0, 0), (0, 0),
                     (dY // 2, dY - dY // 2), (dX // 2, dX - dX // 2)))
    s = gt + xp
    h = jax.nn.relu(jnp.einsum("nchw,dc->ndhw", s, params["wc1"][:, :, 0, 0])
                    + params["bc1"].reshape(1, -1, 1, 1))
    ga = jax.nn.sigmoid(jnp.einsum("nchw,dc->ndhw", h, params["wc2"][:, :, 0, 0])
                        + params["bc2"].reshape(1, 1, 1, 1))
    return ga * g2


# ----------------------------------- main ------------------------------------
if __name__ == "__main__":
    N, Cin, Cout = 2, 4, 8
    Hg = Wg = 8                      # g spatial; transconv output = 17x17
    Hx = Wx = 16                     # x spatial (skip connection, padded to 17x17)

    key = jax.random.PRNGKey(0)
    ks = jax.random.split(key, 8)

    def u(k, shape, fan_in):
        b = 1.0 / np.sqrt(fan_in)
        return jax.random.uniform(k, shape, jnp.float32, -b, b)

    params = {
        "wt1": u(ks[0], (Cin, Cout, K, K), Cin * K * K),   # transconv1 weight (no bias)
        "wt2": u(ks[1], (Cin, Cout, K, K), Cin * K * K),   # transconv2 weight
        "bt2": u(ks[2], (Cout,), Cin * K * K),             # transconv2 bias
        "wc1": u(ks[3], (Cout, Cout, 1, 1), Cout),         # conv1 weight
        "bc1": u(ks[4], (Cout,), Cout),                    # conv1 bias
        "wc2": u(ks[5], (1, Cout, 1, 1), Cout),            # conv2 weight
        "bc2": u(ks[6], (1,), Cout),                       # conv2 bias
    }

    kx, kg = jax.random.split(ks[7])
    x = jax.random.normal(kx, (N, Cout, Hx, Wx), jnp.float32)
    g = jax.random.normal(kg, (N, Cin, Hg, Wg), jnp.float32)

    packed = pack_ga_params(params)                         # once, at "init"
    fwd = jax.jit(ga_forward)

    out = jax.block_until_ready(fwd(x, g, packed))
    ref = jax.block_until_ready(ga_reference(x, g, params))

    # bf16 matmul operands + bf16 output (f32 accumulation, f32 skip connection).
    np.testing.assert_allclose(np.asarray(out.astype(jnp.float32)), np.asarray(ref),
                               rtol=3e-2, atol=3e-2)
    print("KERNEL_OK")
</pallas_src>

<mosaic_0001>
module attributes {stable_mosaic.version = 11 : i64} {
  func.func @ga_kernel(%arg0: i32, %arg1: i32, %arg2: memref<1x16x256xbf16, #tpu.memory_space<vmem>>, %arg3: memref<1x32x256xf32, #tpu.memory_space<vmem>>, %arg4: memref<64x16xbf16, #tpu.memory_space<vmem>>, %arg5: memref<32x1xf32, #tpu.memory_space<vmem>>, %arg6: memref<32x32xbf16, #tpu.memory_space<vmem>>, %arg7: memref<32x1xf32, #tpu.memory_space<vmem>>, %arg8: memref<8x32xbf16, #tpu.memory_space<vmem>>, %arg9: memref<1xf32, #tpu.memory_space<smem>>, %arg10: memref<1x32x256xbf16, #tpu.memory_space<vmem>>) attributes {dimension_semantics = [#tpu.dimension_semantics<parallel>, #tpu.dimension_semantics<parallel>], iteration_bounds = array<i64: 2, 1>, scalar_prefetch = 0 : i64, scratch_operands = 0 : i64, tpu.core_type = #tpu.core_type<tc>, window_params = [{transform_indices = @transform_0, window_bounds = array<i64: 1, 16, 256>}, {transform_indices = @transform_1, window_bounds = array<i64: 1, 32, 256>}, {pipeline_mode = #tpu.pipeline_mode<synchronous>, transform_indices = @transform_2, window_bounds = array<i64: 64, 16>}, {pipeline_mode = #tpu.pipeline_mode<synchronous>, transform_indices = @transform_3, window_bounds = array<i64: 32, 1>}, {pipeline_mode = #tpu.pipeline_mode<synchronous>, transform_indices = @transform_4, window_bounds = array<i64: 32, 32>}, {pipeline_mode = #tpu.pipeline_mode<synchronous>, transform_indices = @transform_5, window_bounds = array<i64: 32, 1>}, {pipeline_mode = #tpu.pipeline_mode<synchronous>, transform_indices = @transform_6, window_bounds = array<i64: 8, 32>}, {transform_indices = @transform_7, window_bounds = array<i64: 1>}, {transform_indices = @transform_8, window_bounds = array<i64: 1, 32, 256>}]} {
    %c0 = arith.constant 0 : index
    %c0_0 = arith.constant 0 : index
    %0 = vector.load %arg4[%c0, %c0_0] : memref<64x16xbf16, #tpu.memory_space<vmem>>, vector<64x16xbf16>
    %c0_1 = arith.constant 0 : index
    %c0_2 = arith.constant 0 : index
    %c0_3 = arith.constant 0 : index
    %1 = vector.load %arg2[%c0_1, %c0_2, %c0_3] : memref<1x16x256xbf16, #tpu.memory_space<vmem>>, vector<1x16x256xbf16>
    %2 = vector.shape_cast %1 : vector<1x16x256xbf16> to vector<16x256xbf16>
    %cst = arith.constant dense<0.000000e+00> : vector<64x256xf32>
    %3 = tpu.matmul %0, %2, %cst {dimension_numbers = #tpu.dot_dimension_numbers<[1], [0], [0], [1], [0, 0, 1, 1], [], []>} : vector<64x16xbf16>, vector<16x256xbf16>, vector<64x256xf32> -> vector<64x256xf32>
    %4 = vector.extract_strided_slice %3 {offsets = [0, 0], sizes = [32, 256], strides = [1, 1]} : vector<64x256xf32> to vector<32x256xf32>
    %5 = vector.extract_strided_slice %3 {offsets = [32, 0], sizes = [32, 256], strides = [1, 1]} : vector<64x256xf32> to vector<32x256xf32>
    %c0_4 = arith.constant 0 : index
    %c0_5 = arith.constant 0 : index
    %6 = vector.load %arg5[%c0_4, %c0_5] : memref<32x1xf32, #tpu.memory_space<vmem>>, vector<32x1xf32>
    %7 = vector.broadcast %6 : vector<32x1xf32> to vector<32x256xf32>
    %8 = arith.addf %5, %7 : vector<32x256xf32>
    %c0_6 = arith.constant 0 : index
    %c0_7 = arith.constant 0 : index
    %c0_8 = arith.constant 0 : index
    %9 = vector.load %arg3[%c0_6, %c0_7, %c0_8] : memref<1x32x256xf32, #tpu.memory_space<vmem>>, vector<1x32x256xf32>
    %10 = vector.shape_cast %9 : vector<1x32x256xf32> to vector<32x256xf32>
    %11 = arith.addf %4, %10 : vector<32x256xf32>
    %c0_9 = arith.constant 0 : index
    %c0_10 = arith.constant 0 : index
    %12 = vector.load %arg6[%c0_9, %c0_10] : memref<32x32xbf16, #tpu.memory_space<vmem>>, vector<32x32xbf16>
    %13 = arith.truncf %11 : vector<32x256xf32> to vector<32x256xbf16>
    %cst_11 = arith.constant dense<0.000000e+00> : vector<32x256xf32>
    %14 = tpu.matmul %12, %13, %cst_11 {dimension_numbers = #tpu.dot_dimension_numbers<[1], [0], [0], [1], [0, 0, 1, 1], [], []>} : vector<32x32xbf16>, vector<32x256xbf16>, vector<32x256xf32> -> vector<32x256xf32>
    %c0_12 = arith.constant 0 : index
    %c0_13 = arith.constant 0 : index
    %15 = vector.load %arg7[%c0_12, %c0_13] : memref<32x1xf32, #tpu.memory_space<vmem>>, vector<32x1xf32>
    %16 = vector.broadcast %15 : vector<32x1xf32> to vector<32x256xf32>
    %17 = arith.addf %14, %16 : vector<32x256xf32>
    %cst_14 = arith.constant 0.000000e+00 : f32
    %18 = vector.broadcast %cst_14 : f32 to vector<32x256xf32>
    %19 = arith.maximumf %17, %18 : vector<32x256xf32>
    %c0_15 = arith.constant 0 : index
    %c0_16 = arith.constant 0 : index
    %20 = vector.load %arg8[%c0_15, %c0_16] : memref<8x32xbf16, #tpu.memory_space<vmem>>, vector<8x32xbf16>
    %21 = arith.truncf %19 : vector<32x256xf32> to vector<32x256xbf16>
    %cst_17 = arith.constant dense<0.000000e+00> : vector<8x256xf32>
    %22 = tpu.matmul %20, %21, %cst_17 {dimension_numbers = #tpu.dot_dimension_numbers<[1], [0], [0], [1], [0, 0, 1, 1], [], []>} : vector<8x32xbf16>, vector<32x256xbf16>, vector<8x256xf32> -> vector<8x256xf32>
    %c0_18 = arith.constant 0 : index
    %23 = memref.load %arg9[%c0_18] : memref<1xf32, #tpu.memory_space<smem>>
    %24 = vector.broadcast %23 : f32 to vector<8x256xf32>
    %25 = arith.addf %22, %24 : vector<8x256xf32>
    %26 = arith.negf %25 : vector<8x256xf32>
    %27 = math.exp %26 : vector<8x256xf32>
    %cst_19 = arith.constant 1.000000e+00 : f32
    %28 = vector.broadcast %cst_19 : f32 to vector<8x256xf32>
    %29 = arith.addf %28, %27 : vector<8x256xf32>
    %30 = arith.divf %28, %29 : vector<8x256xf32>
    %31 = vector.extract_strided_slice %30 {offsets = [0, 0], sizes = [1, 256], strides = [1, 1]} : vector<8x256xf32> to vector<1x256xf32>
    %32 = vector.extract_strided_slice %8 {offsets = [0, 0], sizes = [8, 256], strides = [1, 1]} : vector<32x256xf32> to vector<8x256xf32>
    %33 = vector.broadcast %31 : vector<1x256xf32> to vector<8x256xf32>
    %34 = arith.mulf %33, %32 : vector<8x256xf32>
    %35 = vector.extract_strided_slice %30 {offsets = [1, 0], sizes = [1, 256], strides = [1, 1]} : vector<8x256xf32> to vector<1x256xf32>
    %36 = vector.extract_strided_slice %8 {offsets = [8, 0], sizes = [8, 256], strides = [1, 1]} : vector<32x256xf32> to vector<8x256xf32>
    %37 = vector.broadcast %35 : vector<1x256xf32> to vector<8x256xf32>
    %38 = arith.mulf %37, %36 : vector<8x256xf32>
    %39 = vector.extract_strided_slice %30 {offsets = [2, 0], sizes = [1, 256], strides = [1, 1]} : vector<8x256xf32> to vector<1x256xf32>
    %40 = vector.extract_strided_slice %8 {offsets = [16, 0], sizes = [8, 256], strides = [1, 1]} : vector<32x256xf32> to vector<8x256xf32>
    %41 = vector.broadcast %39 : vector<1x256xf32> to vector<8x256xf32>
    %42 = arith.mulf %41, %40 : vector<8x256xf32>
    %43 = vector.extract_strided_slice %30 {offsets = [3, 0], sizes = [1, 256], strides = [1, 1]} : vector<8x256xf32> to vector<1x256xf32>
    %44 = vector.extract_strided_slice %8 {offsets = [24, 0], sizes = [8, 256], strides = [1, 1]} : vector<32x256xf32> to vector<8x256xf32>
    %45 = vector.broadcast %43 : vector<1x256xf32> to vector<8x256xf32>
    %46 = arith.mulf %45, %44 : vector<8x256xf32>
    %47 = tpu.concatenate %34, %38, %42, %46 in 0 : vector<8x256xf32>, vector<8x256xf32>, vector<8x256xf32>, vector<8x256xf32> -> vector<32x256xf32>
    %48 = arith.truncf %47 : vector<32x256xf32> to vector<32x256xbf16>
    %c0_20 = arith.constant 0 : index
    %c0_21 = arith.constant 0 : index
    %c0_22 = arith.constant 0 : index
    %49 = vector.load %arg10[%c0_20, %c0_21, %c0_22] : memref<1x32x256xbf16, #tpu.memory_space<vmem>>, vector<1x32x256xbf16>
    %50 = vector.shape_cast %49 : vector<1x32x256xbf16> to vector<32x256xbf16>
    %51 = vector.shape_cast %48 : vector<32x256xbf16> to vector<1x32x256xbf16>
    tpu.vector_store %arg10[%c0_20, %c0_21, %c0_22], %51 {strides = array<i32>} : memref<1x32x256xbf16, #tpu.memory_space<vmem>>, vector<1x32x256xbf16>,
    return
  }
  func.func @transform_0(%arg0: i32, %arg1: i32) -> (i32, i32, i32) {
    %c0_i32 = arith.constant 0 : i32
    %c0_i32_0 = arith.constant 0 : i32
    return %arg0, %c0_i32, %arg1 : i32, i32, i32
  }
  func.func @transform_1(%arg0: i32, %arg1: i32) -> (i32, i32, i32) {
    %c0_i32 = arith.constant 0 : i32
    %c0_i32_0 = arith.constant 0 : i32
    return %arg0, %c0_i32, %arg1 : i32, i32, i32
  }
  func.func @transform_2(%arg0: i32, %arg1: i32) -> (i32, i32) {
    %c0_i32 = arith.constant 0 : i32
    %c0_i32_0 = arith.constant 0 : i32
    %c0_i32_1 = arith.constant 0 : i32
    return %c0_i32, %c0_i32_0 : i32, i32
  }
  func.func @transform_3(%arg0: i32, %arg1: i32) -> (i32, i32) {
    %c0_i32 = arith.constant 0 : i32
    %c0_i32_0 = arith.constant 0 : i32
    %c0_i32_1 = arith.constant 0 : i32
    return %c0_i32, %c0_i32_0 : i32, i32
  }
  func.func @transform_4(%arg0: i32, %arg1: i32) -> (i32, i32) {
    %c0_i32 = arith.constant 0 : i32
    %c0_i32_0 = arith.constant 0 : i32
    %c0_i32_1 = arith.constant 0 : i32
    return %c0_i32, %c0_i32_0 : i32, i32
  }
  func.func @transform_5(%arg0: i32, %arg1: i32) -> (i32, i32) {
    %c0_i32 = arith.constant 0 : i32
    %c0_i32_0 = arith.constant 0 : i32
    %c0_i32_1 = arith.constant 0 : i32
    return %c0_i32, %c0_i32_0 : i32, i32
  }
  func.func @transform_6(%arg0: i32, %arg1: i32) -> (i32, i32) {
    %c0_i32 = arith.constant 0 : i32
    %c0_i32_0 = arith.constant 0 : i32
    %c0_i32_1 = arith.constant 0 : i32
    return %c0_i32, %c0_i32_0 : i32, i32
  }
  func.func @transform_7(%arg0: i32, %arg1: i32) -> i32 {
    %c0_i32 = arith.constant 0 : i32
    %c0_i32_0 = arith.constant 0 : i32
    return %c0_i32 : i32
  }
  func.func @transform_8(%arg0: i32, %arg1: i32) -> (i32, i32, i32) {
    %c0_i32 = arith.constant 0 : i32
    %c0_i32_0 = arith.constant 0 : i32
    return %arg0, %c0_i32, %arg1 : i32, i32, i32
  }
}

</mosaic_0001>

<llo_original>
// kernel: ga_forward.1
$region0: #{ga_forward.1}
  #allocation0 [shape = 'u32[]', space=smem, size = 0x4, offset = 0x4, fixed_abs, tag = 'smem constant byte address 0x4 - core index']
  #allocation1 [shape = 'u32[144,128]{1,0:T(1,128)}', space=vmem, size = 0x12000, scoped, tag = 'internal scratch']
  #allocation2 [shape = 'f32[1]{0:T(128)S(6)}', space=smem, size = 0x200, scoped, tag = 'scoped memory for ga_forward.1']
  %s0 = inlined_call_operand.vmem [shape: bf16[2,16,256], index: 0, kind: input, shape index: {}]
  %s1 = inlined_call_operand.vmem [shape: f32[2,32,256], index: 1, kind: input, shape index: {}]
  %s2 = inlined_call_operand.vmem [shape: bf16[64,16], index: 2, kind: input, shape index: {}]
  %s3 = inlined_call_operand.vmem [shape: f32[32,1], index: 3, kind: input, shape index: {}]
  %s4 = inlined_call_operand.vmem [shape: bf16[32,32], index: 4, kind: input, shape index: {}]
  %s5 = inlined_call_operand.vmem [shape: f32[32,1], index: 5, kind: input, shape index: {}]
  %s6 = inlined_call_operand.vmem [shape: bf16[8,32], index: 6, kind: input, shape index: {}]
  %s7 = inlined_call_operand.<no memory space> [shape: f32[1], index: 7, kind: input, shape index: {}]
  %s8 = inlined_call_operand.vmem [shape: bf16[2,32,256], index: 8, kind: output, shape index: {}]
  %s9 = sld [smem:[#allocation0]]
  $region65: #{ga_forward.1} parent=0
    _
  %s11 = ssub.s32 1, %s9
  %s12 = scalar_select 0, %s11, %s9
  %13 = sst [smem:[#allocation2]] %s7
  loop: start=0, step=1, limit=4
  $region2: #{ga_forward.1} parent=0 // loop_pre_header
    _
  $region3: #{ga_forward.1} parent=0 // loop_header
    %s15 = sphi 0, %s19
    %p16 = scmp.ge.s32.totalorder %s15, 4
    %s22 = sphi 0, %s34
    %s23 = sphi 0, %s30
    %s24 = sphi 0, %s22
    %s25 = sphi 0, %s23
    %s26 = sphi 0, %s24
    %s27 = sphi 0, %s25
    %s39 = sphi 0, %s41
    %s42 = sphi 0, %s39
    %s43 = sphi 0, %s42
    %s59 = sphi 0, %s43
    %s67 = sphi 0, %s69
    %s70 = sphi 0, %s67
    %s71 = sphi 0, %s70
    %s87 = sphi 0, %s71
    %s91 = sphi 0, %s91
    %s93 = sphi 0, %s91
    %s94 = sphi 0, %s93
    %s108 = sphi 0, %s94
    %s112 = sphi 0, %s112
    %s114 = sphi 0, %s112
    %s115 = sphi 0, %s114
    %s129 = sphi 0, %s115
    %s133 = sphi 0, %s133
    %s135 = sphi 0, %s133
    %s136 = sphi 0, %s135
    %s150 = sphi 0, %s136
    %s154 = sphi 0, %s154
    %s156 = sphi 0, %s154
    %s157 = sphi 0, %s156
    %s171 = sphi 0, %s157
    %s175 = sphi 0, %s175
    %s177 = sphi 0, %s175
    %s178 = sphi 0, %s177
    %s192 = sphi 0, %s178
    %s196 = sphi 0, %s196
    %s198 = sphi 0, %s196
    %s199 = sphi 0, %s198
    %s213 = sphi 0, %s199
    %s221 = sphi 0, %s223
    %s224 = sphi 0, %s221
    %s225 = sphi 0, %s224
    %s241 = sphi 0, %s225
  $region4: #{ga_forward.1} parent=0 // loop_header_branch
    %18 = sbr.rel (%p16) target = $region8
  $region5: #{ga_forward.1} parent=0 // loop_body
    %s20 = ssub.s32 %s15, 1
    %s21 = ssub.s32 %s15, 2
    %s28 = sadd.s32 1, %s23
    %p29 = scmp.ge.s32.totalorder %s28, 1
    %s30 = scalar_select %p29, 0, %s28
    %s31 = sadd.s32 1, %s22
    %s32 = scalar_select %p29, %s31, %s22
    %p33 = scmp.ge.s32.totalorder %s32, 2
    %s34 = scalar_select %p33, 0, %s32
    %s35 = ssub.s32 %s22, %s34
    %s36 = ssub.s32 %s23, %s30
    %s37 = sor.u32 %s35, %s36
    %p38 = scmp.eq.s32.totalorder %s37, 0
    %s40 = sadd.s32 %s39, 1
    %s41 = scalar_select %p38, %s39, %s40
    %p44 = pneg %p38
    %p45 = scmp.eq.s32.totalorder %s15, 1
    %p46 = por %p44, %p45
    %p47 = scmp.ne.s32.totalorder %s39, %s42
    %p48 = scmp.eq.s32.totalorder %s15, 0
    %p49 = por %p47, %p48
    %p50 = scmp.ne.s32.totalorder %s39, %s42
    %p51 = scmp.eq.s32.totalorder %s20, 1
    %p52 = por %p50, %p51
    %p53 = scmp.ne.s32.totalorder %s42, %s43
    %p54 = scmp.eq.s32.totalorder %s20, 0
    %p55 = por %p53, %p54
    %p56 = scmp.ne.s32.totalorder %s42, %s43
    %p57 = scmp.eq.s32.totalorder %s21, 1
    %p58 = por %p56, %p57
    %p60 = scmp.ne.s32.totalorder %s43, %s59
    %p61 = scmp.eq.s32.totalorder %s21, 0
    %p62 = por %p60, %p61
    %s63 = ssub.s32 %s22, %s34
    %s64 = ssub.s32 %s23, %s30
    %s65 = sor.u32 %s63, %s64
    %p66 = scmp.eq.s32.totalorder %s65, 0
    %s68 = sadd.s32 %s67, 1
    %s69 = scalar_select %p66, %s67, %s68
    %p72 = pneg %p66
    %p73 = scmp.eq.s32.totalorder %s15, 1
    %p74 = por %p72, %p73
    %p75 = scmp.ne.s32.totalorder %s67, %s70
    %p76 = scmp.eq.s32.totalorder %s15, 0
    %p77 = por %p75, %p76
    %p78 = scmp.ne.s32.totalorder %s67, %s70
    %p79 = scmp.eq.s32.totalorder %s20, 1
    %p80 = por %p78, %p79
    %p81 = scmp.ne.s32.totalorder %s70, %s71
    %p82 = scmp.eq.s32.totalorder %s20, 0
    %p83 = por %p81, %p82
    %p84 = scmp.ne.s32.totalorder %s70, %s71
    %p85 = scmp.eq.s32.totalorder %s21, 1
    %p86 = por %p84, %p85
    %p88 = scmp.ne.s32.totalorder %s71, %s87
    %p89 = scmp.eq.s32.totalorder %s21, 0
    %p90 = por %p88, %p89
    %s92 = sadd.s32 %s91, 1
    %p95 = scmp.eq.s32.totalorder %s15, 1
    %p96 = scmp.ne.s32.totalorder %s91, %s93
    %p97 = scmp.eq.s32.totalorder %s15, 0
    %p98 = por %p96, %p97
    %p99 = scmp.ne.s32.totalorder %s91, %s93
    %p100 = scmp.eq.s32.totalorder %s20, 1
    %p101 = por %p99, %p100
    %p102 = scmp.ne.s32.totalorder %s93, %s94
    %p103 = scmp.eq.s32.totalorder %s20, 0
    %p104 = por %p102, %p103
    %p105 = scmp.ne.s32.totalorder %s93, %s94
    %p106 = scmp.eq.s32.totalorder %s21, 1
    %p107 = por %p105, %p106
    %p109 = scmp.ne.s32.totalorder %s94, %s108
    %p110 = scmp.eq.s32.totalorder %s21, 0
    %p111 = por %p109, %p110
    %s113 = sadd.s32 %s112, 1
    %p116 = scmp.eq.s32.totalorder %s15, 1
    %p117 = scmp.ne.s32.totalorder %s112, %s114
    %p118 = scmp.eq.s32.totalorder %s15, 0
    %p119 = por %p117, %p118
    %p120 = scmp.ne.s32.totalorder %s112, %s114
    %p121 = scmp.eq.s32.totalorder %s20, 1
    %p122 = por %p120, %p121
    %p123 = scmp.ne.s32.totalorder %s114, %s115
    %p124 = scmp.eq.s32.totalorder %s20, 0
    %p125 = por %p123, %p124
    %p126 = scmp.ne.s32.totalorder %s114, %s115
    %p127 = scmp.eq.s32.totalorder %s21, 1
    %p128 = por %p126, %p127
    %p130 = scmp.ne.s32.totalorder %s115, %s129
    %p131 = scmp.eq.s32.totalorder %s21, 0
    %p132 = por %p130, %p131
    %s134 = sadd.s32 %s133, 1
    %p137 = scmp.eq.s32.totalorder %s15, 1
    %p138 = scmp.ne.s32.totalorder %s133, %s135
    %p139 = scmp.eq.s32.totalorder %s15, 0
    %p140 = por %p138, %p139
    %p141 = scmp.ne.s32.totalorder %s133, %s135
    %p142 = scmp.eq.s32.totalorder %s20, 1
    %p143 = por %p141, %p142
    %p144 = scmp.ne.s32.totalorder %s135, %s136
    %p145 = scmp.eq.s32.totalorder %s20, 0
    %p146 = por %p144, %p145
    %p147 = scmp.ne.s32.totalorder %s135, %s136
    %p148 = scmp.eq.s32.totalorder %s21, 1
    %p149 = por %p147, %p148
    %p151 = scmp.ne.s32.totalorder %s136, %s150
    %p152 = scmp.eq.s32.totalorder %s21, 0
    %p153 = por %p151, %p152
    %s155 = sadd.s32 %s154, 1
    %p158 = scmp.eq.s32.totalorder %s15, 1
    %p159 = scmp.ne.s32.totalorder %s154, %s156
    %p160 = scmp.eq.s32.totalorder %s15, 0
    %p161 = por %p159, %p160
    %p162 = scmp.ne.s32.totalorder %s154, %s156
    %p163 = scmp.eq.s32.totalorder %s20, 1
    %p164 = por %p162, %p163
    %p165 = scmp.ne.s32.totalorder %s156, %s157
    %p166 = scmp.eq.s32.totalorder %s20, 0
    %p167 = por %p165, %p166
    %p168 = scmp.ne.s32.totalorder %s156, %s157
    %p169 = scmp.eq.s32.totalorder %s21, 1
    %p170 = por %p168, %p169
    %p172 = scmp.ne.s32.totalorder %s157, %s171
    %p173 = scmp.eq.s32.totalorder %s21, 0
    %p174 = por %p172, %p173
    %s176 = sadd.s32 %s175, 1
    %p179 = scmp.eq.s32.totalorder %s15, 1
    %p180 = scmp.ne.s32.totalorder %s175, %s177
    %p181 = scmp.eq.s32.totalorder %s15, 0
    %p182 = por %p180, %p181
    %p183 = scmp.ne.s32.totalorder %s175, %s177
    %p184 = scmp.eq.s32.totalorder %s20, 1
    %p185 = por %p183, %p184
    %p186 = scmp.ne.s32.totalorder %s177, %s178
    %p187 = scmp.eq.s32.totalorder %s20, 0
    %p188 = por %p186, %p187
    %p189 = scmp.ne.s32.totalorder %s177, %s178
    %p190 = scmp.eq.s32.totalorder %s21, 1
    %p191 = por %p189, %p190
    %p193 = scmp.ne.s32.totalorder %s178, %s192
    %p194 = scmp.eq.s32.totalorder %s21, 0
    %p195 = por %p193, %p194
    %s197 = sadd.s32 %s196, 1
    %p200 = scmp.eq.s32.totalorder %s15, 1
    %p201 = scmp.ne.s32.totalorder %s196, %s198
    %p202 = scmp.eq.s32.totalorder %s15, 0
    %p203 = por %p201, %p202
    %p204 = scmp.ne.s32.totalorder %s196, %s198
    %p205 = scmp.eq.s32.totalorder %s20, 1
    %p206 = por %p204, %p205
    %p207 = scmp.ne.s32.totalorder %s198, %s199
    %p208 = scmp.eq.s32.totalorder %s20, 0
    %p209 = por %p207, %p208
    %p210 = scmp.ne.s32.totalorder %s198, %s199
    %p211 = scmp.eq.s32.totalorder %s21, 1
    %p212 = por %p210, %p211
    %p214 = scmp.ne.s32.totalorder %s199, %s213
    %p215 = scmp.eq.s32.totalorder %s21, 0
    %p216 = por %p214, %p215
    %s217 = ssub.s32 %s22, %s34
    %s218 = ssub.s32 %s23, %s30
    %s219 = sor.u32 %s217, %s218
    %p220 = scmp.eq.s32.totalorder %s219, 0
    %s222 = sadd.s32 %s221, 1
    %s223 = scalar_select %p220, %s221, %s222
    %p226 = pneg %p220
    %p227 = scmp.eq.s32.totalorder %s15, 1
    %p228 = por %p226, %p227
    %p229 = scmp.ne.s32.totalorder %s221, %s224
    %p230 = scmp.eq.s32.totalorder %s15, 0
    %p231 = por %p229, %p230
    %p232 = scmp.ne.s32.totalorder %s221, %s224
    %p233 = scmp.eq.s32.totalorder %s20, 1
    %p234 = por %p232, %p233
    %p235 = scmp.ne.s32.totalorder %s224, %s225
    %p236 = scmp.eq.s32.totalorder %s20, 0
    %p237 = por %p235, %p236
    %p238 = scmp.ne.s32.totalorder %s224, %s225
    %p239 = scmp.eq.s32.totalorder %s21, 1
    %p240 = por %p238, %p239
    %p242 = scmp.ne.s32.totalorder %s225, %s241
    %p243 = scmp.eq.s32.totalorder %s21, 0
    %p244 = por %p242, %p243
    %p245 = scmp.le.s32.totalorder 1, %s15
    %p246 = scmp.lt.s32.totalorder %s15, 3
    %p247 = pnand %p245, %p246
    %p248 = pneg %p247
    // Predicated region
    $region9: #{ga_forward.1} parent=5 // pred_check
      _
    $region10: #{ga_forward.1} parent=5 // pred_check_branch
      %250 = sbr.rel (%p247) target = $region12
    $region11: #{ga_forward.1} parent=5 // pred_region
      %s251 = ssub.s32 %s15, 1
      // Predicated region
      $region13: #{ga_forward.1} parent=11 // pred_check
        %p252 = pneg %p104
      $region14: #{ga_forward.1} parent=11 // pred_check_branch
        %254 = sbr.rel (%p252) target = $region16
      $region15: #{ga_forward.1} parent=11 // pred_region
        _
      $region16: #{ga_forward.1} parent=11 // pred_fallthru
        _
      // Predicated region
      $region17: #{ga_forward.1} parent=11 // pred_check
        %p255 = pneg %p125
      $region18: #{ga_forward.1} parent=11 // pred_check_branch
        %257 = sbr.rel (%p255) target = $region20
      $region19: #{ga_forward.1} parent=11 // pred_region
        _
      $region20: #{ga_forward.1} parent=11 // pred_fallthru
        _
      // Predicated region
      $region21: #{ga_forward.1} parent=11 // pred_check
        %p258 = pneg %p146
      $region22: #{ga_forward.1} parent=11 // pred_check_branch
        %260 = sbr.rel (%p258) target = $region24
      $region23: #{ga_forward.1} parent=11 // pred_region
        _
      $region24: #{ga_forward.1} parent=11 // pred_fallthru
        _
      // Predicated region
      $region25: #{ga_forward.1} parent=11 // pred_check
        %p261 = pneg %p167
      $region26: #{ga_forward.1} parent=11 // pred_check_branch
        %263 = sbr.rel (%p261) target = $region28
      $region27: #{ga_forward.1} parent=11 // pred_region
        _
      $region28: #{ga_forward.1} parent=11 // pred_fallthru
        _
      // Predicated region
      $region29: #{ga_forward.1} parent=11 // pred_check
        %p264 = pneg %p188
      $region30: #{ga_forward.1} parent=11 // pred_check_branch
        %266 = sbr.rel (%p264) target = $region32
      $region31: #{ga_forward.1} parent=11 // pred_region
        _
      $region32: #{ga_forward.1} parent=11 // pred_fallthru
        _
      // Predicated region
      $region33: #{ga_forward.1} parent=11 // pred_check
        %p267 = pneg %p209
      $region34: #{ga_forward.1} parent=11 // pred_check_branch
        %269 = sbr.rel (%p267) target = $region36
      $region35: #{ga_forward.1} parent=11 // pred_region
        _
      $region36: #{ga_forward.1} parent=11 // pred_fallthru
        _
    $region12: #{ga_forward.1} parent=5 // pred_fallthru
      _
    %p270 = scmp.lt.s32.totalorder %s15, 2
    // Predicated region
    $region37: #{ga_forward.1} parent=5 // pred_check
      %p271 = pneg %p270
    $region38: #{ga_forward.1} parent=5 // pred_check_branch
      %273 = sbr.rel (%p271) target = $region40
    $region39: #{ga_forward.1} parent=5 // pred_region
      // Predicated region
      $region41: #{ga_forward.1} parent=39 // pred_check
        %p274 = pneg %p49
      $region42: #{ga_forward.1} parent=39 // pred_check_branch
        %276 = sbr.rel (%p274) target = $region44
      $region43: #{ga_forward.1} parent=39 // pred_region
        %s277 = smul.u32 2, %s23
        %p278 = scmp.lt.s32.totalorder %s22, 1
        %s279 = scalar_select %p278, %s22, 1
        %p280 = scmp.lt.s32.totalorder %s277, 1
        %s281 = scalar_select %p280, %s277, 1
        %s282 = smul.addr %s279, 4
        %s283 = sadd.s32 %s281, %s282
        %s284 = smul.addr %s283, 4
        %s285 = scalar_lea.vmem %s0, %s284
        %s286 = smul.u32 2, %s23
      $region44: #{ga_forward.1} parent=39 // pred_fallthru
        _
      // Predicated region
      $region45: #{ga_forward.1} parent=39 // pred_check
        %p287 = pneg %p77
      $region46: #{ga_forward.1} parent=39 // pred_check_branch
        %289 = sbr.rel (%p287) target = $region48
      $region47: #{ga_forward.1} parent=39 // pred_region
        %s290 = smul.u32 2, %s23
        %p291 = scmp.lt.s32.totalorder %s22, 1
        %s292 = scalar_select %p291, %s22, 1
        %p293 = scmp.lt.s32.totalorder %s290, 1
        %s294 = scalar_select %p293, %s290, 1
        %s295 = smul.addr %s292, 8
        %s296 = sadd.s32 %s294, %s295
        %s297 = smul.addr %s296, 8
        %s298 = scalar_lea.vmem %s1, %s297
        %s299 = smul.u32 2, %s23
      $region48: #{ga_forward.1} parent=39 // pred_fallthru
        _
    $region40: #{ga_forward.1} parent=5 // pred_fallthru
      _
    %p300 = scmp.le.s32.totalorder 1, %s15
    %p301 = scmp.lt.s32.totalorder %s15, 3
    %p302 = pnand %p300, %p301
    %p303 = pneg %p302
    // Predicated region
    $region49: #{ga_forward.1} parent=5 // pred_check
      _
    $region50: #{ga_forward.1} parent=5 // pred_check_branch
      %305 = sbr.rel (%p302) target = $region52
    $region51: #{ga_forward.1} parent=5 // pred_region
      %s306 = ssub.s32 %s15, 1
      %s307 = smul.u32 2, %s25
      %p308 = scmp.lt.s32.totalorder %s24, 1
      %s309 = scalar_select %p308, %s24, 1
      %p310 = scmp.lt.s32.totalorder %s307, 1
      %s311 = scalar_select %p310, %s307, 1
      %s312 = smul.addr %s309, 4
      %s313 = sadd.s32 %s311, %s312
      %s314 = smul.addr %s313, 4
      %s315 = scalar_lea.vmem %s0, %s314
      %p316 = pneg %p55
      %p317 = pneg %p52
      %s318 = smul.u32 2, %s25
      %p319 = scmp.lt.s32.totalorder %s24, 1
      %s320 = scalar_select %p319, %s24, 1
      %p321 = scmp.lt.s32.totalorder %s318, 1
      %s322 = scalar_select %p321, %s318, 1
      %s323 = smul.addr %s320, 8
      %s324 = sadd.s32 %s322, %s323
      %s325 = smul.addr %s324, 8
      %s326 = scalar_lea.vmem %s1, %s325
      %p327 = pneg %p83
      %p328 = pneg %p80
      %p329 = pneg %p104
      %p330 = pneg %p101
      %p331 = pneg %p125
      %p332 = pneg %p122
      %p333 = pneg %p146
      %p334 = pneg %p143
      %p335 = pneg %p167
      %p336 = pneg %p164
      %p337 = pneg %p188
      %p338 = pneg %p185
      %p339 = pneg %p209
      %p340 = pneg %p206
      %p341 = pneg %p237
      %p342 = pneg %p234
      %s343 = smul.u32 2, %s25
      %p344 = scmp.lt.s32.totalorder %s24, 1
      %s345 = scalar_select %p344, %s24, 1
      %p346 = scmp.lt.s32.totalorder %s343, 1
      %s347 = scalar_select %p346, %s343, 1
      %s348 = smul.addr %s345, 8
      %s349 = sadd.s32 %s347, %s348
      %s350 = smul.addr %s349, 4
      %s351 = scalar_lea.vmem %s8, %s350
      %s352 = smul.u32 2, %s25
      %p353 = scmp.lt.s32.totalorder %s24, 1
      %s354 = scalar_select %p353, %s24, 1
      %p355 = scmp.lt.s32.totalorder %s352, 1
      %s356 = scalar_select %p355, %s352, 1
      %s357 = smul.addr %s354, 4
      %s358 = sadd.s32 %s356, %s357
      %s359 = smul.addr %s358, 4
      %s360 = scalar_lea.vmem %s0, %s359
      %s361 = smul.u32 2, %s25
      %s362 = smul.u32 2, %s25
      %p363 = scmp.lt.s32.totalorder %s24, 1
      %s364 = scalar_select %p363, %s24, 1
      %p365 = scmp.lt.s32.totalorder %s362, 1
      %s366 = scalar_select %p365, %s362, 1
      %s367 = smul.addr %s364, 8
      %s368 = sadd.s32 %s366, %s367
      %s369 = smul.addr %s368, 8
      %s370 = scalar_lea.vmem %s1, %s369
      %s371 = smul.u32 2, %s25
      %s372 = smul.u32 2, %s25
      %p373 = scmp.lt.s32.totalorder %s24, 1
      %s374 = scalar_select %p373, %s24, 1
      %p375 = scmp.lt.s32.totalorder %s372, 1
      %s376 = scalar_select %p375, %s372, 1
      %s377 = smul.addr %s374, 8
      %s378 = sadd.s32 %s376, %s377
      %s379 = smul.addr %s378, 4
      %s380 = scalar_lea.vmem %s8, %s379
      %s381 = smul.u32 2, %s25
      %v383 = vld [vmem:[%s2] sm:$0xf]
      %v384 = vld [vmem:[%s2 + $0x4] sm:$0xf]
      %v385 = vld [vmem:[%s2 + $0x8] sm:$0xf]
      %v386 = vld [vmem:[%s2 + $0xc] sm:$0xf]
      %v387 = vld [vmem:[%s2 + $0x10] sm:$0xf]
      %v388 = vld [vmem:[%s2 + $0x14] sm:$0xf]
      %v389 = vld [vmem:[%s2 + $0x18] sm:$0xf]
      %v390 = vld [vmem:[%s2 + $0x1c] sm:$0xf]
      %v391 = vld [vmem:[%s360] sm:$0xff]
      %v392 = vld [vmem:[%s360 + $0x8] sm:$0xff]
      %v401 = vunpack.c.l.b16 %v383
      %v402 = vunpack.c.l.b16 %v384
      %v403 = vunpack.c.l.b16 %v385
      %v404 = vunpack.c.l.b16 %v386
      %v405 = vunpack.c.l.b16 %v387
      %v406 = vunpack.c.l.b16 %v388
      %v407 = vunpack.c.l.b16 %v389
      %v408 = vunpack.c.l.b16 %v390
      %v409 = vpack.c.b16 %v402, %v401
      %v410 = vpack.c.b16 %v404, %v403
      %v411 = vpack.c.b16 %v406, %v405
      %v412 = vpack.c.b16 %v408, %v407
      %v415 = vunpack.c.l.b16 %v391
      %v416 = vunpack.c.h.b16 %v391
      %v417 = vunpack.c.l.b16 %v392
      %v418 = vunpack.c.h.b16 %v392
      %v419 = vpack.c.b16 %v417, %v415
      %v420 = vpack.c.b16 %v418, %v416
      %vm423 = vcmask 130048
      %v425 = vsel %vm423, %v409, 0
      %v428 = vsel %vm423, %v410, 0
      %v431 = vsel %vm423, %v411, 0
      %v434 = vsel %vm423, %v412, 0
      %436 = vmatprep.subr.bf16.mxu0 0
      %437 = vmatpush1.bf16.msra.mxu0 0
      %438 = vmatprep.subr.bf16.mxu0 0
      %439 = vmatpush1.bf16.msra.mxu0 0
      %440 = vmatprep.subr.bf16.mxu0 0
      %441 = vmatpush1.bf16.msra.mxu0 0
      %442 = vmatprep.subr.bf16.mxu0 0
      %443 = vmatpush1.bf16.msra.mxu0 0
      %444 = vmatprep.subr.bf16.mxu0 0
      %445 = vmatpush1.bf16.msra.mxu0 0
      %446 = vmatprep.subr.bf16.mxu0 0
      %447 = vmatpush1.bf16.msra.mxu0 0
      %448 = vmatprep.subr.bf16.mxu0 0
      %449 = vmatpush1.bf16.msra.mxu0 0
      %450 = vmatprep.subr.bf16.mxu0 %v420
      %451 = vmatpush1.bf16.msra.mxu0 %v419
      %452 = vmatprep.subr.bf16.mxu0 0
      %453 = vmatpush2.bf16.msra.mxu0 0
      %454 = vmatprep.subr.bf16.mxu0 0
      %455 = vmatpush2.bf16.msra.mxu0 0
      %456 = vmatprep.subr.bf16.mxu0 0
      %457 = vmatpush2.bf16.msra.mxu0 0
      %458 = vmatprep.subr.bf16.mxu0 0
      %459 = vmatpush2.bf16.msra.mxu0 0
      %460 = vmatprep.subr.bf16.mxu0 0
      %461 = vmatpush2.bf16.msra.mxu0 0
      %462 = vmatprep.subr.bf16.mxu0 0
      %463 = vmatpush2.bf16.msra.mxu0 0
      %464 = vmatprep.subr.bf16.mxu0 0
      %465 = vmatpush2.bf16.msra.mxu0 0
      %466 = vmatprep.subr.bf16.mxu0 0
      %467 = vmatpush2.bf16.msra.mxu0 0
      %468 = vmatprep.mubr.bf16.mxu0 0
      %469 = vmatmul.mubr.bf16.gmra.mxu0 %v425
      %v470 = vpop.f32.mrf.mxu0
      %v471 = vadd.f32 0.0, %v470
      %v472 = vpop.f32.mrf.mxu0
      %v473 = vadd.f32 0.0, %v472
      %v474 = vpop.f32.mrf.mxu0
      %v475 = vadd.f32 0.0, %v474
      %v476 = vpop.f32.mrf.mxu0
      %v477 = vadd.f32 0.0, %v476
      %478 = vmatprep.mubr.bf16.mxu0 0
      %479 = vmatmul.mubr.bf16.gmra.mxu0 %v428
      %v480 = vpop.f32.mrf.mxu0
      %v481 = vadd.f32 0.0, %v480
      %v482 = vpop.f32.mrf.mxu0
      %v483 = vadd.f32 0.0, %v482
      %v484 = vpop.f32.mrf.mxu0
      %v485 = vadd.f32 0.0, %v484
      %v486 = vpop.f32.mrf.mxu0
      %v487 = vadd.f32 0.0, %v486
      %488 = vmatprep.mubr.bf16.mxu0 0
      %489 = vmatmul.mubr.bf16.gmra.mxu0 %v431
      %v490 = vpop.f32.mrf.mxu0
      %v491 = vadd.f32 0.0, %v490
      %v492 = vpop.f32.mrf.mxu0
      %v493 = vadd.f32 0.0, %v492
      %v494 = vpop.f32.mrf.mxu0
      %v495 = vadd.f32 0.0, %v494
      %v496 = vpop.f32.mrf.mxu0
      %v497 = vadd.f32 0.0, %v496
      %498 = vmatprep.mubr.bf16.mxu0 0
      %499 = vmatmul.mubr.bf16.gmra.mxu0 %v434
      %v500 = vpop.f32.mrf.mxu0
      %v501 = vadd.f32 0.0, %v500
      %v502 = vpop.f32.mrf.mxu0
      %v503 = vadd.f32 0.0, %v502
      %v504 = vpop.f32.mrf.mxu0
      %v505 = vadd.f32 0.0, %v504
      %v506 = vpop.f32.mrf.mxu0
      %v507 = vadd.f32 0.0, %v506
      %508 = vdwg.mxu0
      %v509 = vld [vmem:[%s3] sm:$0xff]
      %v510 = vld [vmem:[%s3 + $0x8] sm:$0xff]
      %v511 = vld [vmem:[%s3 + $0x10] sm:$0xff]
      %v512 = vld [vmem:[%s3 + $0x18] sm:$0xff]
      %514 = vset.pattern.permute.xlu0 0
      %515 = vperm.xlu0 %514, %v509
      %v516 = vpop.permute.xlu0 %515
      %519 = vset.pattern.permute.xlu0 0
      %520 = vperm.xlu0 %519, %v510
      %v521 = vpop.permute.xlu0 %520
      %524 = vset.pattern.permute.xlu0 0
      %525 = vperm.xlu0 %524, %v511
      %v526 = vpop.permute.xlu0 %525
      %529 = vset.pattern.permute.xlu0 0
      %530 = vperm.xlu0 %529, %v512
      %v531 = vpop.permute.xlu0 %530
      %v533 = vadd.f32 %v491, %v516
      %v534 = vadd.f32 %v493, %v516
      %v535 = vadd.f32 %v495, %v521
      %v536 = vadd.f32 %v497, %v521
      %v537 = vadd.f32 %v501, %v526
      %v538 = vadd.f32 %v503, %v526
      %v539 = vadd.f32 %v505, %v531
      %v540 = vadd.f32 %v507, %v531
      %v541 = vld [vmem:[%s370] sm:$0xff]
      %v542 = vld [vmem:[%s370 + $0x8] sm:$0xff]
      %v543 = vld [vmem:[%s370 + $0x10] sm:$0xff]
      %v544 = vld [vmem:[%s370 + $0x18] sm:$0xff]
      %v545 = vld [vmem:[%s370 + $0x20] sm:$0xff]
      %v546 = vld [vmem:[%s370 + $0x28] sm:$0xff]
      %v547 = vld [vmem:[%s370 + $0x30] sm:$0xff]
      %v548 = vld [vmem:[%s370 + $0x38] sm:$0xff]
      %v549 = vadd.f32 %v471, %v541
      %v550 = vadd.f32 %v473, %v542
      %v551 = vadd.f32 %v475, %v543
      %v552 = vadd.f32 %v477, %v544
      %v553 = vadd.f32 %v481, %v545
      %v554 = vadd.f32 %v483, %v546
      %v555 = vadd.f32 %v485, %v547
      %v556 = vadd.f32 %v487, %v548
      %v557 = vld [vmem:[%s4] sm:$0xf]
      %v558 = vld [vmem:[%s4 + $0x4] sm:$0xf]
      %v559 = vld [vmem:[%s4 + $0x8] sm:$0xf]
      %v560 = vld [vmem:[%s4 + $0xc] sm:$0xf]
      %v561 = vpack.c.bf16 %v551, %v549
      %v562 = vpack.c.bf16 %v552, %v550
      %v563 = vpack.c.bf16 %v555, %v553
      %v564 = vpack.c.bf16 %v556, %v554
      %v565 = vld [vmem:[%s5] sm:$0xff]
      %v566 = vld [vmem:[%s5 + $0x8] sm:$0xff]
      %v567 = vld [vmem:[%s5 + $0x10] sm:$0xff]
      %v568 = vld [vmem:[%s5 + $0x18] sm:$0xff]
      %570 = vset.pattern.permute.xlu0 0
      %571 = vperm.xlu0 %570, %v565
      %v572 = vpop.permute.xlu0 %571
      %575 = vset.pattern.permute.xlu0 0
      %576 = vperm.xlu0 %575, %v566
      %v577 = vpop.permute.xlu0 %576
      %580 = vset.pattern.permute.xlu0 0
      %581 = vperm.xlu0 %580, %v567
      %v582 = vpop.permute.xlu0 %581
      %585 = vset.pattern.permute.xlu0 0
      %586 = vperm.xlu0 %585, %v568
      %v587 = vpop.permute.xlu0 %586
      %v593 = vunpack.c.l.b16 %v557
      %v594 = vunpack.c.l.b16 %v558
      %v595 = vunpack.c.l.b16 %v559
      %v596 = vunpack.c.l.b16 %v560
      %v597 = vpack.c.b16 %v594, %v593
      %v598 = vpack.c.b16 %v596, %v595
      %vm599 = vcmask 261120
      %v601 = vsel %vm599, %v597, 0
      %v604 = vsel %vm599, %v598, 0
      %606 = vmatprep.subr.bf16.mxu0 0
      %607 = vmatpush1.bf16.msra.mxu0 0
      %608 = vmatprep.subr.bf16.mxu0 0
      %609 = vmatpush1.bf16.msra.mxu0 0
      %610 = vmatprep.subr.bf16.mxu0 0
      %611 = vmatpush1.bf16.msra.mxu0 0
      %612 = vmatprep.subr.bf16.mxu0 0
      %613 = vmatpush1.bf16.msra.mxu0 0
      %614 = vmatprep.subr.bf16.mxu0 0
      %615 = vmatpush1.bf16.msra.mxu0 0
      %616 = vmatprep.subr.bf16.mxu0 0
      %617 = vmatpush1.bf16.msra.mxu0 0
      %618 = vmatprep.subr.bf16.mxu0 %v564
      %619 = vmatpush1.bf16.msra.mxu0 %v563
      %620 = vmatprep.subr.bf16.mxu0 %v562
      %621 = vmatpush1.bf16.msra.mxu0 %v561
      %622 = vmatprep.subr.bf16.mxu0 0
      %623 = vmatpush2.bf16.msra.mxu0 0
      %624 = vmatprep.subr.bf16.mxu0 0
      %625 = vmatpush2.bf16.msra.mxu0 0
      %626 = vmatprep.subr.bf16.mxu0 0
      %627 = vmatpush2.bf16.msra.mxu0 0
      %628 = vmatprep.subr.bf16.mxu0 0
      %629 = vmatpush2.bf16.msra.mxu0 0
      %630 = vmatprep.subr.bf16.mxu0 0
      %631 = vmatpush2.bf16.msra.mxu0 0
      %632 = vmatprep.subr.bf16.mxu0 0
      %633 = vmatpush2.bf16.msra.mxu0 0
      %634 = vmatprep.subr.bf16.mxu0 0
      %635 = vmatpush2.bf16.msra.mxu0 0
      %636 = vmatprep.subr.bf16.mxu0 0
      %637 = vmatpush2.bf16.msra.mxu0 0
      %638 = vmatprep.mubr.bf16.mxu0 0
      %639 = vmatmul.mubr.bf16.gmra.mxu0 %v601
      %v640 = vpop.f32.mrf.mxu0
      %v641 = vadd.f32 %v572, %v640
      %v642 = vpop.f32.mrf.mxu0
      %v643 = vadd.f32 %v572, %v642
      %v644 = vpop.f32.mrf.mxu0
      %v645 = vadd.f32 %v577, %v644
      %v646 = vpop.f32.mrf.mxu0
      %v647 = vadd.f32 %v577, %v646
      %648 = vmatprep.mubr.bf16.mxu0 0
      %649 = vmatmul.mubr.bf16.gmra.mxu0 %v604
      %v650 = vpop.f32.mrf.mxu0
      %v651 = vadd.f32 %v582, %v650
      %v652 = vpop.f32.mrf.mxu0
      %v653 = vadd.f32 %v582, %v652
      %v654 = vpop.f32.mrf.mxu0
      %v655 = vadd.f32 %v587, %v654
      %v656 = vpop.f32.mrf.mxu0
      %v657 = vadd.f32 %v587, %v656
      %658 = vdwg.mxu0
      %v659 = vmax.f32 %v641, 0.0
      %v660 = vmax.f32 %v643, 0.0
      %v661 = vmax.f32 %v645, 0.0
      %v662 = vmax.f32 %v647, 0.0
      %v663 = vmax.f32 %v651, 0.0
      %v664 = vmax.f32 %v653, 0.0
      %v665 = vmax.f32 %v655, 0.0
      %v666 = vmax.f32 %v657, 0.0
      %v667 = vld [vmem:[%s6] sm:$0xf]
      %v668 = vpack.c.bf16 %v661, %v659
      %v669 = vpack.c.bf16 %v662, %v660
      %v670 = vpack.c.bf16 %v665, %v663
      %v671 = vpack.c.bf16 %v666, %v664
      %s672 = sld [smem:[#allocation2]]
      %v673 = vstv %s672
      %v675 = vsel %vm599, %v667, 0
      %677 = vmatprep.subr.bf16.mxu0 0
      %678 = vmatpush1.bf16.msra.mxu0 0
      %679 = vmatprep.subr.bf16.mxu0 0
      %680 = vmatpush1.bf16.msra.mxu0 0
      %681 = vmatprep.subr.bf16.mxu0 0
      %682 = vmatpush1.bf16.msra.mxu0 0
      %683 = vmatprep.subr.bf16.mxu0 0
      %684 = vmatpush1.bf16.msra.mxu0 0
      %685 = vmatprep.subr.bf16.mxu0 0
      %686 = vmatpush1.bf16.msra.mxu0 0
      %687 = vmatprep.subr.bf16.mxu0 0
      %688 = vmatpush1.bf16.msra.mxu0 0
      %689 = vmatprep.subr.bf16.mxu0 %v671
      %690 = vmatpush1.bf16.msra.mxu0 %v670
      %691 = vmatprep.subr.bf16.mxu0 %v669
      %692 = vmatpush1.bf16.msra.mxu0 %v668
      %693 = vmatprep.subr.bf16.mxu0 0
      %694 = vmatpush2.bf16.msra.mxu0 0
      %695 = vmatprep.subr.bf16.mxu0 0
      %696 = vmatpush2.bf16.msra.mxu0 0
      %697 = vmatprep.subr.bf16.mxu0 0
      %698 = vmatpush2.bf16.msra.mxu0 0
      %699 = vmatprep.subr.bf16.mxu0 0
      %700 = vmatpush2.bf16.msra.mxu0 0
      %701 = vmatprep.subr.bf16.mxu0 0
      %702 = vmatpush2.bf16.msra.mxu0 0
      %703 = vmatprep.subr.bf16.mxu0 0
      %704 = vmatpush2.bf16.msra.mxu0 0
      %705 = vmatprep.subr.bf16.mxu0 0
      %706 = vmatpush2.bf16.msra.mxu0 0
      %707 = vmatprep.subr.bf16.mxu0 0
      %708 = vmatpush2.bf16.msra.mxu0 0
      %709 = vmatprep.mubr.bf16.mxu0 0
      %710 = vmatmul.mubr.bf16.gmra.mxu0 %v675
      %v711 = vpop.f32.mrf.mxu0
      %v712 = vadd.f32 %v673, %v711
      %v713 = vpop.f32.mrf.mxu0
      %v714 = vadd.f32 %v673, %v713
      %v715 = vpop.f32.mrf.mxu0
      %v716 = vpop.f32.mrf.mxu0
      %717 = vdwg.mxu0
      %v718 = vxor.u32 %v712, 2147483648
      %v719 = vxor.u32 %v714, 2147483648
      %v720 = vmul.f32 %v718, 1.442695
      %v721 = vpow.pop %v720
      %v722 = vmul.f32 %v719, 1.442695
      %v723 = vpow.pop %v722
      %v724 = vadd.f32 %v721, 1.0
      %v725 = vadd.f32 %v723, 1.0
      %v726 = vrcp.pop %v724
      %v727 = vmul.f32 1.0, %v726
      %v728 = vrcp.pop %v725
      %v729 = vmul.f32 1.0, %v728
      %v730 = vlaneseq
      %v731 = vshrl.u32 %v730, 7
      %v732 = vsub.s32 0, %v731
      %v733 = vrot.slane %v727, %v732
      %v734 = vlaneseq
      %v735 = vshrl.u32 %v734, 7
      %v736 = vsub.s32 0, %v735
      %v737 = vrot.slane %v729, %v736
      %v738 = vmul.f32 %v733, %v533
      %v739 = vmul.f32 %v737, %v534
      %v740 = vlaneseq
      %v741 = vshrl.u32 %v740, 7
      %v742 = vsub.s32 1, %v741
      %v743 = vrot.slane %v727, %v742
      %v744 = vlaneseq
      %v745 = vshrl.u32 %v744, 7
      %v746 = vsub.s32 1, %v745
      %v747 = vrot.slane %v729, %v746
      %v748 = vmul.f32 %v743, %v535
      %v749 = vmul.f32 %v747, %v536
      %v750 = vlaneseq
      %v751 = vshrl.u32 %v750, 7
      %v752 = vsub.s32 2, %v751
      %v753 = vrot.slane %v727, %v752
      %v754 = vlaneseq
      %v755 = vshrl.u32 %v754, 7
      %v756 = vsub.s32 2, %v755
      %v757 = vrot.slane %v729, %v756
      %v758 = vmul.f32 %v753, %v537
      %v759 = vmul.f32 %v757, %v538
      %v760 = vlaneseq
      %v761 = vshrl.u32 %v760, 7
      %v762 = vsub.s32 3, %v761
      %v763 = vrot.slane %v727, %v762
      %v764 = vlaneseq
      %v765 = vshrl.u32 %v764, 7
      %v766 = vsub.s32 3, %v765
      %v767 = vrot.slane %v729, %v766
      %v768 = vmul.f32 %v763, %v539
      %v769 = vmul.f32 %v767, %v540
      %v770 = vpack.c.bf16 %v748, %v738
      %v771 = vpack.c.bf16 %v749, %v739
      %v772 = vpack.c.bf16 %v768, %v758
      %v773 = vpack.c.bf16 %v769, %v759
      %v778 = vunpack.c.l.b16 %v770
      %v779 = vunpack.c.l.b16 %v771
      %v780 = vunpack.c.h.b16 %v770
      %v781 = vunpack.c.h.b16 %v771
      %v782 = vunpack.c.l.b16 %v772
      %v783 = vunpack.c.l.b16 %v773
      %v784 = vunpack.c.h.b16 %v772
      %v785 = vunpack.c.h.b16 %v773
      %v786 = vpack.c.b16 %v779, %v778
      %v787 = vpack.c.b16 %v781, %v780
      %v788 = vpack.c.b16 %v783, %v782
      %v789 = vpack.c.b16 %v785, %v784
      %794 = vst [vmem:[%s380] sm:$0xff] %v786
      %795 = vst [vmem:[%s380 + $0x8] sm:$0xff] %v787
      %796 = vst [vmem:[%s380 + $0x10] sm:$0xff] %v788
      %797 = vst [vmem:[%s380 + $0x18] sm:$0xff] %v789
      %s798 = smul.u32 2, %s25
      %p799 = scmp.lt.s32.totalorder %s24, 1
      %s800 = scalar_select %p799, %s24, 1
      %p801 = scmp.lt.s32.totalorder %s798, 1
      %s802 = scalar_select %p801, %s798, 1
      %s803 = smul.addr %s800, 8
      %s804 = sadd.s32 %s802, %s803
      %s805 = smul.addr %s804, 4
      %s806 = scalar_lea.vmem %s8, %s805
      // Predicated region
      $region53: #{ga_forward.1} parent=51 // pred_check
        %p807 = pneg %p234
      $region54: #{ga_forward.1} parent=51 // pred_check_branch
        %809 = sbr.rel (%p807) target = $region56
      $region55: #{ga_forward.1} parent=51 // pred_region
        %s810 = smul.u32 2, %s25
      $region56: #{ga_forward.1} parent=51 // pred_fallthru
        _
    $region52: #{ga_forward.1} parent=5 // pred_fallthru
      _
    %p811 = scmp.le.s32.totalorder 2, %s15
    // Predicated region
    $region57: #{ga_forward.1} parent=5 // pred_check
      %p812 = pneg %p811
    $region58: #{ga_forward.1} parent=5 // pred_check_branch
      %814 = sbr.rel (%p812) target = $region60
    $region59: #{ga_forward.1} parent=5 // pred_region
      %s815 = ssub.s32 %s15, 2
      // Predicated region
      $region61: #{ga_forward.1} parent=59 // pred_check
        %p816 = pneg %p240
      $region62: #{ga_forward.1} parent=59 // pred_check_branch
        %818 = sbr.rel (%p816) target = $region64
      $region63: #{ga_forward.1} parent=59 // pred_region
        %s819 = smul.u32 2, %s27
        %p820 = scmp.lt.s32.totalorder %s26, 1
        %s821 = scalar_select %p820, %s26, 1
        %p822 = scmp.lt.s32.totalorder %s819, 1
        %s823 = scalar_select %p822, %s819, 1
        %s824 = smul.addr %s821, 8
        %s825 = sadd.s32 %s823, %s824
        %s826 = smul.addr %s825, 4
        %s827 = scalar_lea.vmem %s8, %s826
      $region64: #{ga_forward.1} parent=59 // pred_fallthru
        _
    $region60: #{ga_forward.1} parent=5 // pred_fallthru
      _
  $region6: #{ga_forward.1} parent=0 // loop_footer
    %s19 = sadd.s32 1, %s15
  $region7: #{ga_forward.1} parent=0 // loop_footer_branch
    %14 = sbr.rel target = $region3
  $region8: #{ga_forward.1} parent=0 // loop_exit
    _

</llo_original>
